<compile_context>
chip_gen: v7x
topology: tpu7x:2x2x1
jax: 0.10.0
libtpu: 0.0.40
codegen_flags: <defaults>
</compile_context>

<pallas_src>
import jax
import jax.numpy as jnp
from jax.experimental import pallas as pl
from jax.experimental.pallas import tpu as pltpu


def _round_up(n, m):
    return ((n + m - 1) // m) * m


def ca_net_kernel(x_ref, wmu_ref, wlv_ref, bmu_ref, blv_ref, eps_ref,
                  c_ref, mu_ref, lv_ref):
    x = x_ref[...]

    # fc + relu, computed as two lane-aligned matmuls (weight pre-split in the
    # wrapper) -> no in-kernel lane-offset slicing of the fc output.
    mu = jnp.dot(x, wmu_ref[...], preferred_element_type=jnp.float32)
    mu = jnp.maximum(mu + bmu_ref[...], 0.0)          # relu(fc)[:, :c_dim]
    lv = jnp.dot(x, wlv_ref[...], preferred_element_type=jnp.float32)
    lv = jnp.maximum(lv + blv_ref[...], 0.0)          # relu(fc)[:, c_dim:]

    # reparametrize: c = eps * exp(0.5 * logvar) + mu   (exp -> EUP slot)
    c_ref[...] = eps_ref[...] * jnp.exp(0.5 * lv) + mu
    mu_ref[...] = mu
    lv_ref[...] = lv


def ca_net_forward(text_embedding, w, b, eps, *, block_b=512,
                   use_bf16_matmul=False):
    """text_embedding: (B, t_dim); w: (t_dim, 2*c_dim) (transposed vs PyTorch);
    b: (1, 2*c_dim) or (2*c_dim,); eps: (B, c_dim).
    Returns (c_code, mu, logvar), each (B, c_dim) float32."""
    B, t_dim = text_embedding.shape
    two_c = w.shape[1]
    c_dim = two_c // 2

    # Split fc params once in the wrapper (trace-time XLA slices, not in-kernel).
    w_mu, w_lv = w[:, :c_dim], w[:, c_dim:]
    b2 = jnp.reshape(b, (1, two_c)).astype(jnp.float32)
    b_mu, b_lv = b2[:, :c_dim], b2[:, c_dim:]

    if use_bf16_matmul:
        # bf16 MXU operands (v6e/v7x), f32 accumulation + f32 epilogue.
        x_in = text_embedding.astype(jnp.bfloat16)
        w_mu = w_mu.astype(jnp.bfloat16)
        w_lv = w_lv.astype(jnp.bfloat16)
    else:
        x_in = text_embedding.astype(jnp.float32)
        w_mu = w_mu.astype(jnp.float32)
        w_lv = w_lv.astype(jnp.float32)
    eps = eps.astype(jnp.float32)

    # Pad batch to a multiple of 8 sublanes and pick a row block <= block_b.
    b8 = _round_up(B, 8)
    tb = min(block_b, b8)
    b_pad = _round_up(b8, tb)
    if b_pad != B:
        x_in = jnp.pad(x_in, ((0, b_pad - B), (0, 0)))
        eps = jnp.pad(eps, ((0, b_pad - B), (0, 0)))

    grid = (b_pad // tb,)

    row_spec_x = pl.BlockSpec((tb, t_dim), lambda i: (i, 0))
    row_spec_c = pl.BlockSpec((tb, c_dim), lambda i: (i, 0))
    full_w = pl.BlockSpec((t_dim, c_dim), lambda i: (0, 0))
    full_b = pl.BlockSpec((1, c_dim), lambda i: (0, 0))

    out_shapes = (
        jax.ShapeDtypeStruct((b_pad, c_dim), jnp.float32),  # c_code
        jax.ShapeDtypeStruct((b_pad, c_dim), jnp.float32),  # mu
        jax.ShapeDtypeStruct((b_pad, c_dim), jnp.float32),  # logvar
    )

    c_code, mu, logvar = pl.pallas_call(
        ca_net_kernel,
        out_shape=out_shapes,
        grid=grid,
        in_specs=[
            row_spec_x,   # x block
            full_w,       # W_mu (resident)
            full_w,       # W_lv (resident)
            full_b,       # b_mu
            full_b,       # b_lv
            row_spec_c,   # eps block
        ],
        out_specs=(row_spec_c, row_spec_c, row_spec_c),
        compiler_params=pltpu.CompilerParams(
            dimension_semantics=("parallel",)),
    )(x_in, w_mu, w_lv, b_mu, b_lv, eps)

    if b_pad != B:
        c_code, mu, logvar = c_code[:B], mu[:B], logvar[:B]
    return c_code, mu, logvar


if __name__ == "__main__":
    # Small config consistent with the module:
    #   t_dim = cfg.TEXT.DIMENSION * cfg.VIDEO_LEN = 16 * 4 = 64
    #   c_dim = cfg.GAN.CONDITION_DIM               = 32
    B = 8
    TEXT_DIMENSION = 16
    VIDEO_LEN = 4
    t_dim = TEXT_DIMENSION * VIDEO_LEN
    c_dim = 32

    key = jax.random.PRNGKey(0)
    k_x, k_w, k_b, k_eps = jax.random.split(key, 4)

    # Deterministic parameter init (nn.Linear-style uniform bound 1/sqrt(t_dim)).
    bound = 1.0 / (t_dim ** 0.5)
    w = jax.random.uniform(k_w, (t_dim, 2 * c_dim), jnp.float32, -bound, bound)
    b = jax.random.uniform(k_b, (1, 2 * c_dim), jnp.float32, -bound, bound)

    text_embedding = jax.random.normal(k_x, (B, t_dim), jnp.float32)
    # eps ~ N(0,1), generated outside the kernel for deterministic checking.
    eps = jax.random.normal(k_eps, (B, c_dim), jnp.float32)

    c_code, mu, logvar = ca_net_forward(text_embedding, w, b, eps)
    jax.block_until_ready((c_code, mu, logvar))

    # Pure-JAX reference for sanity.
    y_ref = jnp.maximum(text_embedding @ w + b, 0.0)
    mu_ref = y_ref[:, :c_dim]
    lv_ref = y_ref[:, c_dim:]
    c_ref = eps * jnp.exp(0.5 * lv_ref) + mu_ref
    assert jnp.allclose(mu, mu_ref, atol=1e-5)
    assert jnp.allclose(logvar, lv_ref, atol=1e-5)
    assert jnp.allclose(c_code, c_ref, atol=1e-5)

    print("KERNEL_OK")
</pallas_src>

<mosaic_0001>
module attributes {stable_mosaic.version = 11 : i64} {
  func.func @ca_net_kernel(%arg0: i32, %arg1: memref<8x64xf32, #tpu.memory_space<vmem>>, %arg2: memref<64x32xf32, #tpu.memory_space<vmem>>, %arg3: memref<64x32xf32, #tpu.memory_space<vmem>>, %arg4: memref<1x32xf32, #tpu.memory_space<vmem>>, %arg5: memref<1x32xf32, #tpu.memory_space<vmem>>, %arg6: memref<8x32xf32, #tpu.memory_space<vmem>>, %arg7: memref<8x32xf32, #tpu.memory_space<vmem>>, %arg8: memref<8x32xf32, #tpu.memory_space<vmem>>, %arg9: memref<8x32xf32, #tpu.memory_space<vmem>>) attributes {dimension_semantics = [#tpu.dimension_semantics<parallel>], iteration_bounds = array<i64: 1>, scalar_prefetch = 0 : i64, scratch_operands = 0 : i64, tpu.core_type = #tpu.core_type<tc>, window_params = [{transform_indices = @transform_0, window_bounds = array<i64: 8, 64>}, {pipeline_mode = #tpu.pipeline_mode<synchronous>, transform_indices = @transform_1, window_bounds = array<i64: 64, 32>}, {pipeline_mode = #tpu.pipeline_mode<synchronous>, transform_indices = @transform_2, window_bounds = array<i64: 64, 32>}, {pipeline_mode = #tpu.pipeline_mode<synchronous>, transform_indices = @transform_3, window_bounds = array<i64: 1, 32>}, {pipeline_mode = #tpu.pipeline_mode<synchronous>, transform_indices = @transform_4, window_bounds = array<i64: 1, 32>}, {transform_indices = @transform_5, window_bounds = array<i64: 8, 32>}, {transform_indices = @transform_6, window_bounds = array<i64: 8, 32>}, {transform_indices = @transform_7, window_bounds = array<i64: 8, 32>}, {transform_indices = @transform_8, window_bounds = array<i64: 8, 32>}]} {
    %c0 = arith.constant 0 : index
    %c0_0 = arith.constant 0 : index
    %0 = vector.load %arg1[%c0, %c0_0] : memref<8x64xf32, #tpu.memory_space<vmem>>, vector<8x64xf32>
    %c0_1 = arith.constant 0 : index
    %c0_2 = arith.constant 0 : index
    %1 = vector.load %arg2[%c0_1, %c0_2] : memref<64x32xf32, #tpu.memory_space<vmem>>, vector<64x32xf32>
    %cst = arith.constant dense<0.000000e+00> : vector<8x32xf32>
    %2 = tpu.matmul %0, %1, %cst {dimension_numbers = #tpu.dot_dimension_numbers<[1], [0], [0], [1], [0, 0, 1, 1], [], []>} : vector<8x64xf32>, vector<64x32xf32>, vector<8x32xf32> -> vector<8x32xf32>
    %c0_3 = arith.constant 0 : index
    %c0_4 = arith.constant 0 : index
    %3 = vector.load %arg4[%c0_3, %c0_4] : memref<1x32xf32, #tpu.memory_space<vmem>>, vector<1x32xf32>
    %4 = vector.broadcast %3 : vector<1x32xf32> to vector<8x32xf32>
    %5 = arith.addf %2, %4 : vector<8x32xf32>
    %cst_5 = arith.constant 0.000000e+00 : f32
    %6 = vector.broadcast %cst_5 : f32 to vector<8x32xf32>
    %7 = arith.maximumf %5, %6 : vector<8x32xf32>
    %c0_6 = arith.constant 0 : index
    %c0_7 = arith.constant 0 : index
    %8 = vector.load %arg3[%c0_6, %c0_7] : memref<64x32xf32, #tpu.memory_space<vmem>>, vector<64x32xf32>
    %cst_8 = arith.constant dense<0.000000e+00> : vector<8x32xf32>
    %9 = tpu.matmul %0, %8, %cst_8 {dimension_numbers = #tpu.dot_dimension_numbers<[1], [0], [0], [1], [0, 0, 1, 1], [], []>} : vector<8x64xf32>, vector<64x32xf32>, vector<8x32xf32> -> vector<8x32xf32>
    %c0_9 = arith.constant 0 : index
    %c0_10 = arith.constant 0 : index
    %10 = vector.load %arg5[%c0_9, %c0_10] : memref<1x32xf32, #tpu.memory_space<vmem>>, vector<1x32xf32>
    %11 = vector.broadcast %10 : vector<1x32xf32> to vector<8x32xf32>
    %12 = arith.addf %9, %11 : vector<8x32xf32>
    %cst_11 = arith.constant 0.000000e+00 : f32
    %13 = vector.broadcast %cst_11 : f32 to vector<8x32xf32>
    %14 = arith.maximumf %12, %13 : vector<8x32xf32>
    %c0_12 = arith.constant 0 : index
    %c0_13 = arith.constant 0 : index
    %15 = vector.load %arg6[%c0_12, %c0_13] : memref<8x32xf32, #tpu.memory_space<vmem>>, vector<8x32xf32>
    %cst_14 = arith.constant 5.000000e-01 : f32
    %16 = vector.broadcast %cst_14 : f32 to vector<8x32xf32>
    %17 = arith.mulf %16, %14 : vector<8x32xf32>
    %18 = math.exp %17 : vector<8x32xf32>
    %19 = arith.mulf %15, %18 : vector<8x32xf32>
    %20 = arith.addf %19, %7 : vector<8x32xf32>
    %c0_15 = arith.constant 0 : index
    %c0_16 = arith.constant 0 : index
    %21 = vector.load %arg7[%c0_15, %c0_16] : memref<8x32xf32, #tpu.memory_space<vmem>>, vector<8x32xf32>
    tpu.vector_store %arg7[%c0_15, %c0_16], %20 {strides = array<i32>} : memref<8x32xf32, #tpu.memory_space<vmem>>, vector<8x32xf32>,
    %c0_17 = arith.constant 0 : index
    %c0_18 = arith.constant 0 : index
    %22 = vector.load %arg8[%c0_17, %c0_18] : memref<8x32xf32, #tpu.memory_space<vmem>>, vector<8x32xf32>
    tpu.vector_store %arg8[%c0_17, %c0_18], %7 {strides = array<i32>} : memref<8x32xf32, #tpu.memory_space<vmem>>, vector<8x32xf32>,
    %c0_19 = arith.constant 0 : index
    %c0_20 = arith.constant 0 : index
    %23 = vector.load %arg9[%c0_19, %c0_20] : memref<8x32xf32, #tpu.memory_space<vmem>>, vector<8x32xf32>
    tpu.vector_store %arg9[%c0_19, %c0_20], %14 {strides = array<i32>} : memref<8x32xf32, #tpu.memory_space<vmem>>, vector<8x32xf32>,
    return
  }
  func.func @transform_0(%arg0: i32) -> (i32, i32) {
    %c0_i32 = arith.constant 0 : i32
    %c0_i32_0 = arith.constant 0 : i32
    return %arg0, %c0_i32 : i32, i32
  }
  func.func @transform_1(%arg0: i32) -> (i32, i32) {
    %c0_i32 = arith.constant 0 : i32
    %c0_i32_0 = arith.constant 0 : i32
    %c0_i32_1 = arith.constant 0 : i32
    return %c0_i32, %c0_i32_0 : i32, i32
  }
  func.func @transform_2(%arg0: i32) -> (i32, i32) {
    %c0_i32 = arith.constant 0 : i32
    %c0_i32_0 = arith.constant 0 : i32
    %c0_i32_1 = arith.constant 0 : i32
    return %c0_i32, %c0_i32_0 : i32, i32
  }
  func.func @transform_3(%arg0: i32) -> (i32, i32) {
    %c0_i32 = arith.constant 0 : i32
    %c0_i32_0 = arith.constant 0 : i32
    %c0_i32_1 = arith.constant 0 : i32
    return %c0_i32, %c0_i32_0 : i32, i32
  }
  func.func @transform_4(%arg0: i32) -> (i32, i32) {
    %c0_i32 = arith.constant 0 : i32
    %c0_i32_0 = arith.constant 0 : i32
    %c0_i32_1 = arith.constant 0 : i32
    return %c0_i32, %c0_i32_0 : i32, i32
  }
  func.func @transform_5(%arg0: i32) -> (i32, i32) {
    %c0_i32 = arith.constant 0 : i32
    %c0_i32_0 = arith.constant 0 : i32
    return %arg0, %c0_i32 : i32, i32
  }
  func.func @transform_6(%arg0: i32) -> (i32, i32) {
    %c0_i32 = arith.constant 0 : i32
    %c0_i32_0 = arith.constant 0 : i32
    return %arg0, %c0_i32 : i32, i32
  }
  func.func @transform_7(%arg0: i32) -> (i32, i32) {
    %c0_i32 = arith.constant 0 : i32
    %c0_i32_0 = arith.constant 0 : i32
    return %arg0, %c0_i32 : i32, i32
  }
  func.func @transform_8(%arg0: i32) -> (i32, i32) {
    %c0_i32 = arith.constant 0 : i32
    %c0_i32_0 = arith.constant 0 : i32
    return %arg0, %c0_i32 : i32, i32
  }
}

</mosaic_0001>

<llo_original>
// kernel: tpu_custom_call.1
$region0: #{tpu_custom_call.1}
  #allocation0 [shape = 'u32[]', space=smem, size = 0x4, offset = 0x4, fixed_abs, tag = 'smem constant byte address 0x4 - core index']
  #allocation1 [shape = 'u32[144,128]{1,0:T(1,128)}', space=vmem, size = 0x12000, scoped, tag = 'internal scratch']
  %s0 = inlined_call_operand.vmem [shape: f32[8,64], index: 0, kind: input, shape index: {}]
  %s1 = inlined_call_operand.vmem [shape: f32[64,32], index: 1, kind: input, shape index: {}]
  %s2 = inlined_call_operand.vmem [shape: f32[64,32], index: 2, kind: input, shape index: {}]
  %s3 = inlined_call_operand.vmem [shape: f32[1,32], index: 3, kind: input, shape index: {}]
  %s4 = inlined_call_operand.vmem [shape: f32[1,32], index: 4, kind: input, shape index: {}]
  %s5 = inlined_call_operand.vmem [shape: f32[8,32], index: 5, kind: input, shape index: {}]
  %s6 = inlined_call_operand.hbm [shape: f32[8,32], index: 6, kind: output, shape index: {0}]
  %s7 = inlined_call_operand.hbm [shape: f32[8,32], index: 7, kind: output, shape index: {1}]
  %s8 = inlined_call_operand.hbm [shape: f32[8,32], index: 8, kind: output, shape index: {2}]
  %9 = xla_tuple %s6, %s7, %s8
  %s10 = sld [smem:[#allocation0]]
  $region50: #{tpu_custom_call.1} parent=0
    _
  %s12 = ssub.s32 1, %s10
  %s13 = scalar_select 0, %s12, %s10
  $region1: #{tpu_custom_call.1} parent=0
    #allocation2 [shape = 'u8[4096]{0}', space=vmem, size = 0x1000, scoped, tag = 'output window, operand 0, single buffered']
    #allocation3 [shape = 's32[1]{0}', space=sflag, size = 0x4, scoped, tag = 'scoped memory for tpu_custom_call.1']
    #allocation4 [shape = 'u8[4096]{0}', space=vmem, size = 0x1000, scoped, tag = 'output window, operand 1, single buffered']
    #allocation5 [shape = 's32[1]{0}', space=sflag, size = 0x4, scoped, tag = 'scoped memory for tpu_custom_call.1']
    #allocation6 [shape = 'u8[4096]{0}', space=vmem, size = 0x1000, scoped, tag = 'output window, operand 2, single buffered']
    %14 = vsyncpa [#allocation3], 0
    %15 = vsyncpa [#allocation5], 0
    // Predicated region
    $region2: #{tpu_custom_call.1} parent=1 // pred_check
      _
    $region3: #{tpu_custom_call.1} parent=1 // pred_check_branch
      %17 = sbr.rel (0) target = $region5
    $region4: #{tpu_custom_call.1} parent=1 // pred_region
      _
    $region5: #{tpu_custom_call.1} parent=1 // pred_fallthru
      _
    // Predicated region
    $region6: #{tpu_custom_call.1} parent=1 // pred_check
      _
    $region7: #{tpu_custom_call.1} parent=1 // pred_check_branch
      %19 = sbr.rel (0) target = $region9
    $region8: #{tpu_custom_call.1} parent=1 // pred_region
      _
    $region9: #{tpu_custom_call.1} parent=1 // pred_fallthru
      _
    // Predicated region
    $region10: #{tpu_custom_call.1} parent=1 // pred_check
      _
    $region11: #{tpu_custom_call.1} parent=1 // pred_check_branch
      %21 = sbr.rel (0) target = $region13
    $region12: #{tpu_custom_call.1} parent=1 // pred_region
      _
    $region13: #{tpu_custom_call.1} parent=1 // pred_fallthru
      _
    // Predicated region
    $region14: #{tpu_custom_call.1} parent=1 // pred_check
      _
    $region15: #{tpu_custom_call.1} parent=1 // pred_check_branch
      %23 = sbr.rel (0) target = $region17
    $region16: #{tpu_custom_call.1} parent=1 // pred_region
      _
    $region17: #{tpu_custom_call.1} parent=1 // pred_fallthru
      _
    // Predicated region
    $region18: #{tpu_custom_call.1} parent=1 // pred_check
      _
    $region19: #{tpu_custom_call.1} parent=1 // pred_check_branch
      %25 = sbr.rel (0) target = $region21
    $region20: #{tpu_custom_call.1} parent=1 // pred_region
      _
    $region21: #{tpu_custom_call.1} parent=1 // pred_fallthru
      _
    // Predicated region
    $region22: #{tpu_custom_call.1} parent=1 // pred_check
      _
    $region23: #{tpu_custom_call.1} parent=1 // pred_check_branch
      %27 = sbr.rel (0) target = $region25
    $region24: #{tpu_custom_call.1} parent=1 // pred_region
      _
    $region25: #{tpu_custom_call.1} parent=1 // pred_fallthru
      _
    %v28 = vld [vmem:[%s0] sm:$0xff]
    %v29 = vld [vmem:[%s1] sm:$0xff]
    %v30 = vld [vmem:[%s1 + $0x8] sm:$0xff]
    %v31 = vld [vmem:[%s1 + $0x10] sm:$0xff]
    %v32 = vld [vmem:[%s1 + $0x18] sm:$0xff]
    %v33 = vld [vmem:[%s1 + $0x20] sm:$0xff]
    %v34 = vld [vmem:[%s1 + $0x28] sm:$0xff]
    %v35 = vld [vmem:[%s1 + $0x30] sm:$0xff]
    %v36 = vld [vmem:[%s1 + $0x38] sm:$0xff]
    %v37 = vld [vmem:[%s3] sm:$0x1]
    %v39 = vlaneseq
    %v40 = vshrl.u32 %v39, 7
    %v41 = vsub.s32 0, %v40
    %v42 = vrot.slane %v37, %v41
    %vm44 = vcmask 523264
    %v46 = vsel %vm44, %v28, 0
    %48 = vmatprep.subr.mxu0 0.0
    %49 = vmatpush1.msra.mxu0 %v29
    %50 = vmatprep.subr.mxu0 0.0
    %51 = vmatpush1.msra.mxu0 %v30
    %52 = vmatprep.subr.mxu0 0.0
    %53 = vmatpush1.msra.mxu0 %v31
    %54 = vmatprep.subr.mxu0 0.0
    %55 = vmatpush1.msra.mxu0 %v32
    %56 = vmatprep.subr.mxu0 0.0
    %57 = vmatpush1.msra.mxu0 %v33
    %58 = vmatprep.subr.mxu0 0.0
    %59 = vmatpush1.msra.mxu0 %v34
    %60 = vmatprep.subr.mxu0 0.0
    %61 = vmatpush1.msra.mxu0 %v35
    %62 = vmatprep.subr.mxu0 0.0
    %63 = vmatpush1.msra.mxu0 %v36
    %64 = vmatprep.subr.mxu0 0.0
    %65 = vmatpush1.msra.mxu0 0.0
    %66 = vmatprep.subr.mxu0 0.0
    %67 = vmatpush1.msra.mxu0 0.0
    %68 = vmatprep.subr.mxu0 0.0
    %69 = vmatpush1.msra.mxu0 0.0
    %70 = vmatprep.subr.mxu0 0.0
    %71 = vmatpush1.msra.mxu0 0.0
    %72 = vmatprep.subr.mxu0 0.0
    %73 = vmatpush1.msra.mxu0 0.0
    %74 = vmatprep.subr.mxu0 0.0
    %75 = vmatpush1.msra.mxu0 0.0
    %76 = vmatprep.subr.mxu0 0.0
    %77 = vmatpush1.msra.mxu0 0.0
    %78 = vmatprep.subr.mxu0 0.0
    %79 = vmatpush1.msra.mxu0 0.0
    %80 = vmatprep.subr.mxu0 0.0
    %81 = vmatpush1.msra.mxu0 0.0
    %82 = vmatprep.subr.mxu0 0.0
    %83 = vmatpush1.msra.mxu0 0.0
    %84 = vmatprep.subr.mxu0 0.0
    %85 = vmatpush1.msra.mxu0 0.0
    %86 = vmatprep.subr.mxu0 0.0
    %87 = vmatpush1.msra.mxu0 0.0
    %88 = vmatprep.subr.mxu0 0.0
    %89 = vmatpush1.msra.mxu0 0.0
    %90 = vmatprep.subr.mxu0 0.0
    %91 = vmatpush1.msra.mxu0 0.0
    %92 = vmatprep.subr.mxu0 0.0
    %93 = vmatpush1.msra.mxu0 0.0
    %94 = vmatprep.subr.mxu0 0.0
    %95 = vmatpush1.msra.mxu0 0.0
    %96 = vmatprep.subr.mxu0 0.0
    %97 = vmatpush1.msra.mxu0 0.0
    %98 = vmatprep.subr.mxu0 0.0
    %99 = vmatpush1.msra.mxu0 0.0
    %100 = vmatprep.subr.mxu0 0.0
    %101 = vmatpush1.msra.mxu0 0.0
    %102 = vmatprep.subr.mxu0 0.0
    %103 = vmatpush1.msra.mxu0 0.0
    %104 = vmatprep.subr.mxu0 0.0
    %105 = vmatpush1.msra.mxu0 0.0
    %106 = vmatprep.subr.mxu0 0.0
    %107 = vmatpush1.msra.mxu0 0.0
    %108 = vmatprep.subr.mxu0 0.0
    %109 = vmatpush1.msra.mxu0 0.0
    %110 = vmatprep.subr.mxu0 0.0
    %111 = vmatpush1.msra.mxu0 0.0
    %112 = vmatprep.mubr.f32.mxu0 0.0
    %113 = vmatmul.mubr.f32.gmra.mrb[0].mxu0 %v46
    %v114 = vpop.f32.mrb[0].mxu0
    %v115 = vadd.f32 %v42, %v114
    %v116 = vpop.f32.mrb[0].mxu0
    %117 = vdwg.mxu0
    %v118 = vmax.f32 %v115, 0.0
    %v119 = vld [vmem:[%s2] sm:$0xff]
    %v120 = vld [vmem:[%s2 + $0x8] sm:$0xff]
    %v121 = vld [vmem:[%s2 + $0x10] sm:$0xff]
    %v122 = vld [vmem:[%s2 + $0x18] sm:$0xff]
    %v123 = vld [vmem:[%s2 + $0x20] sm:$0xff]
    %v124 = vld [vmem:[%s2 + $0x28] sm:$0xff]
    %v125 = vld [vmem:[%s2 + $0x30] sm:$0xff]
    %v126 = vld [vmem:[%s2 + $0x38] sm:$0xff]
    %v127 = vld [vmem:[%s4] sm:$0x1]
    %v129 = vlaneseq
    %v130 = vshrl.u32 %v129, 7
    %v131 = vsub.s32 0, %v130
    %v132 = vrot.slane %v127, %v131
    %134 = vmatprep.subr.mxu0 0.0
    %135 = vmatpush1.msra.mxu0 %v119
    %136 = vmatprep.subr.mxu0 0.0
    %137 = vmatpush1.msra.mxu0 %v120
    %138 = vmatprep.subr.mxu0 0.0
    %139 = vmatpush1.msra.mxu0 %v121
    %140 = vmatprep.subr.mxu0 0.0
    %141 = vmatpush1.msra.mxu0 %v122
    %142 = vmatprep.subr.mxu0 0.0
    %143 = vmatpush1.msra.mxu0 %v123
    %144 = vmatprep.subr.mxu0 0.0
    %145 = vmatpush1.msra.mxu0 %v124
    %146 = vmatprep.subr.mxu0 0.0
    %147 = vmatpush1.msra.mxu0 %v125
    %148 = vmatprep.subr.mxu0 0.0
    %149 = vmatpush1.msra.mxu0 %v126
    %150 = vmatprep.subr.mxu0 0.0
    %151 = vmatpush1.msra.mxu0 0.0
    %152 = vmatprep.subr.mxu0 0.0
    %153 = vmatpush1.msra.mxu0 0.0
    %154 = vmatprep.subr.mxu0 0.0
    %155 = vmatpush1.msra.mxu0 0.0
    %156 = vmatprep.subr.mxu0 0.0
    %157 = vmatpush1.msra.mxu0 0.0
    %158 = vmatprep.subr.mxu0 0.0
    %159 = vmatpush1.msra.mxu0 0.0
    %160 = vmatprep.subr.mxu0 0.0
    %161 = vmatpush1.msra.mxu0 0.0
    %162 = vmatprep.subr.mxu0 0.0
    %163 = vmatpush1.msra.mxu0 0.0
    %164 = vmatprep.subr.mxu0 0.0
    %165 = vmatpush1.msra.mxu0 0.0
    %166 = vmatprep.subr.mxu0 0.0
    %167 = vmatpush1.msra.mxu0 0.0
    %168 = vmatprep.subr.mxu0 0.0
    %169 = vmatpush1.msra.mxu0 0.0
    %170 = vmatprep.subr.mxu0 0.0
    %171 = vmatpush1.msra.mxu0 0.0
    %172 = vmatprep.subr.mxu0 0.0
    %173 = vmatpush1.msra.mxu0 0.0
    %174 = vmatprep.subr.mxu0 0.0
    %175 = vmatpush1.msra.mxu0 0.0
    %176 = vmatprep.subr.mxu0 0.0
    %177 = vmatpush1.msra.mxu0 0.0
    %178 = vmatprep.subr.mxu0 0.0
    %179 = vmatpush1.msra.mxu0 0.0
    %180 = vmatprep.subr.mxu0 0.0
    %181 = vmatpush1.msra.mxu0 0.0
    %182 = vmatprep.subr.mxu0 0.0
    %183 = vmatpush1.msra.mxu0 0.0
    %184 = vmatprep.subr.mxu0 0.0
    %185 = vmatpush1.msra.mxu0 0.0
    %186 = vmatprep.subr.mxu0 0.0
    %187 = vmatpush1.msra.mxu0 0.0
    %188 = vmatprep.subr.mxu0 0.0
    %189 = vmatpush1.msra.mxu0 0.0
    %190 = vmatprep.subr.mxu0 0.0
    %191 = vmatpush1.msra.mxu0 0.0
    %192 = vmatprep.subr.mxu0 0.0
    %193 = vmatpush1.msra.mxu0 0.0
    %194 = vmatprep.subr.mxu0 0.0
    %195 = vmatpush1.msra.mxu0 0.0
    %196 = vmatprep.subr.mxu0 0.0
    %197 = vmatpush1.msra.mxu0 0.0
    %198 = vmatprep.mubr.f32.mxu0 0.0
    %199 = vmatmul.mubr.f32.gmra.mrb[0].mxu0 %v46
    %v200 = vpop.f32.mrb[0].mxu0
    %v201 = vadd.f32 %v132, %v200
    %v202 = vpop.f32.mrb[0].mxu0
    %203 = vdwg.mxu0
    %v204 = vmax.f32 %v201, 0.0
    %v205 = vld [vmem:[%s5] sm:$0xff]
    %v206 = vmul.f32 %v204, 0.5
    %v207 = vmul.f32 %v206, 1.442695
    %v208 = vpow.pop %v207
    %v209 = vmul.f32 %v205, %v208
    %v210 = vadd.f32 %v209, %v118
    %vm211 = vcmask 261120
    %212 = vst.msk [vmem:[#allocation2] sm:$0xff] %vm211, %v210
    %213 = vst.msk [vmem:[#allocation4] sm:$0xff] %vm211, %v118
    %214 = vst.msk [vmem:[#allocation6] sm:$0xff] %vm211, %v204
    // Predicated region
    $region26: #{tpu_custom_call.1} parent=1 // pred_check
      _
    $region27: #{tpu_custom_call.1} parent=1 // pred_check_branch
      %216 = sbr.rel (0) target = $region29
    $region28: #{tpu_custom_call.1} parent=1 // pred_region
      %s218 = ssub.s32 128, 128
      %219 = vsyncadd [#allocation3], %s218
      %s221 = sshll.u32 [#allocation2], 4
      %s222 = int_to_ptr.vmem [resolvable:$true] %s221
      %224 = dma.vmem_to_hbm [thread:$0]  %s222, 128, %s6, [#allocation3]
    $region29: #{tpu_custom_call.1} parent=1 // pred_fallthru
      _
    // Predicated region
    $region30: #{tpu_custom_call.1} parent=1 // pred_check
      _
    $region31: #{tpu_custom_call.1} parent=1 // pred_check_branch
      %226 = sbr.rel (0) target = $region33
    $region32: #{tpu_custom_call.1} parent=1 // pred_region
      %s228 = ssub.s32 128, 128
      %229 = vsyncadd [#allocation5], %s228
      %s231 = sshll.u32 [#allocation4], 4
      %s232 = int_to_ptr.vmem [resolvable:$true] %s231
      %234 = dma.vmem_to_hbm [thread:$0]  %s232, 128, %s7, [#allocation5]
    $region33: #{tpu_custom_call.1} parent=1 // pred_fallthru
      _
    // Predicated region
    $region34: #{tpu_custom_call.1} parent=1 // pred_check
      _
    $region35: #{tpu_custom_call.1} parent=1 // pred_check_branch
      %236 = sbr.rel (0) target = $region37
    $region36: #{tpu_custom_call.1} parent=1 // pred_region
      %s238 = ssub.s32 128, 128
      %239 = vsyncadd [#allocation5], %s238
      %s241 = sshll.u32 [#allocation6], 4
      %s242 = int_to_ptr.vmem [resolvable:$true] %s241
      %244 = dma.vmem_to_hbm [thread:$0]  %s242, 128, %s8, [#allocation5]
    $region37: #{tpu_custom_call.1} parent=1 // pred_fallthru
      _
    // Predicated region
    $region38: #{tpu_custom_call.1} parent=1 // pred_check
      _
    $region39: #{tpu_custom_call.1} parent=1 // pred_check_branch
      %246 = sbr.rel (0) target = $region41
    $region40: #{tpu_custom_call.1} parent=1 // pred_region
      %247 = dma.done [#allocation3], 128
    $region41: #{tpu_custom_call.1} parent=1 // pred_fallthru
      _
    // Predicated region
    $region42: #{tpu_custom_call.1} parent=1 // pred_check
      _
    $region43: #{tpu_custom_call.1} parent=1 // pred_check_branch
      %249 = sbr.rel (0) target = $region45
    $region44: #{tpu_custom_call.1} parent=1 // pred_region
      %250 = dma.done [#allocation5], 128
    $region45: #{tpu_custom_call.1} parent=1 // pred_fallthru
      _
    // Predicated region
    $region46: #{tpu_custom_call.1} parent=1 // pred_check
      _
    $region47: #{tpu_custom_call.1} parent=1 // pred_check_branch
      %252 = sbr.rel (0) target = $region49
    $region48: #{tpu_custom_call.1} parent=1 // pred_region
      %253 = dma.done [#allocation5], 128
    $region49: #{tpu_custom_call.1} parent=1 // pred_fallthru
      _
    %254 = vsyncpa [#allocation3], 1
    %255 = vsyncpa [#allocation5], 1

</llo_original>
